<compile_context>
chip_gen: v7x
topology: tpu7x:2x2x1
jax: 0.10.0
libtpu: 0.0.40
codegen_flags: <defaults>
</compile_context>

<pallas_src>
import functools

import jax
import jax.numpy as jnp
from jax import lax
from jax.experimental import pallas as pl
from jax.experimental.pallas import tpu as pltpu

_NEG = jnp.float32(-1e30)   # finite "minus infinity" (safe through the MXU)


def _round_up(x, m):
    return ((x + m - 1) // m) * m


def _choose_tiling(n, max_tile_rows):
    """Pick (tile_rows, grid, padded_rows) minimizing tail padding."""
    g = -(-n // max_tile_rows)                  # ceil
    if n >= 1024:
        g = max(g, 2)                           # v7x megacore: >=2 parallel steps
    tile = _round_up(-(-n // g), 8)
    return tile, g, tile * g


# --------------------------------------------------------------------------
# Kernels
# --------------------------------------------------------------------------

def _gather_logits(idx_ref, table_ref):
    """Embedding gather as an exact one-hot matmul on the MXU."""
    tm = idx_ref.shape[0]
    vp = table_ref.shape[1]
    cols = lax.broadcasted_iota(jnp.int32, (tm, vp), 1)          # (TM, Vp)
    onehot = (cols == idx_ref[...]).astype(jnp.float32)          # (TM, Vp)
    logits = jnp.dot(onehot, table_ref[...],
                     preferred_element_type=jnp.float32)         # (TM, Vp)
    return cols, logits


def _ce_rows(cols, logits, tgt_ref, n_valid):
    """Per-row cross entropy, zeroed on padded rows."""
    tm = logits.shape[0]
    # Padded vocab columns already hold -1e30 (from the padded table), so the
    # logsumexp needs no extra masking; exp(-1e30 - m) underflows to 0.
    m = jnp.max(logits, axis=-1, keepdims=True)                  # (TM, 1)
    lse = m + jnp.log(jnp.sum(jnp.exp(logits - m), axis=-1, keepdims=True))
    tgt_onehot = (cols == tgt_ref[...]).astype(jnp.float32)      # (TM, Vp)
    correct = jnp.sum(tgt_onehot * logits, axis=-1, keepdims=True)
    rows = lax.broadcasted_iota(jnp.int32, (tm, 1), 0) + pl.program_id(0) * tm
    return jnp.where(rows < n_valid, lse - correct, 0.0)


def _bigram_logits_kernel(idx_ref, table_ref, logits_ref):
    _, logits = _gather_logits(idx_ref, table_ref)
    logits_ref[...] = logits                                     # lane-dense store


def _bigram_loss_kernel(idx_ref, tgt_ref, table_ref, logits_ref, loss_ref,
                        *, n_valid):
    cols, logits = _gather_logits(idx_ref, table_ref)
    logits_ref[...] = logits
    loss_ref[...] = _ce_rows(cols, logits, tgt_ref, n_valid)


def _bigram_loss_only_kernel(idx_ref, tgt_ref, table_ref, loss_ref, *, n_valid):
    # Training fast path: no logits HBM writeback at all.
    cols, logits = _gather_logits(idx_ref, table_ref)
    loss_ref[...] = _ce_rows(cols, logits, tgt_ref, n_valid)


# --------------------------------------------------------------------------
# Wrapper
# --------------------------------------------------------------------------

def bigram_forward(idx, table, targets=None, *, return_logits=True,
                   max_tile_rows=2048):
    """Mirrors BigramLanguageModel.forward.

    Returns (logits, loss):
      targets is None                       -> ((B, T, V) logits, None)
      targets given, return_logits=True     -> ((B*T, V) logits, scalar loss)
      targets given, return_logits=False    -> (None, scalar loss)   [fast path]
    """
    B, T = idx.shape
    V = table.shape[0]
    N = B * T

    Vp = _round_up(V, 128)                       # lane-dense vocab axis
    if Vp * Vp * 4 > 24 * 1024 * 1024:
        # TODO(synk): vocab-tiled grid axis + online logsumexp for large V; the
        # fully-resident (Vp, Vp) fp32 table does not scale past ~2K vocab.
        raise NotImplementedError("vocab too large for a fully-resident table")

    tile_rows, G, Np = _choose_tiling(N, max_tile_rows)

    idx_flat = jnp.pad(idx.reshape(N, 1).astype(jnp.int32),
                       ((0, Np - N), (0, 0)))
    # Real columns keep their values; padded columns are -1e30 so they drop out
    # of the logsumexp with zero in-kernel masking work.  Padded rows (never
    # selected by a valid one-hot) are zero.
    table_p = jnp.pad(
        jnp.pad(table.astype(jnp.float32), ((0, 0), (0, Vp - V)),
                constant_values=_NEG),
        ((0, Vp - V), (0, 0)))

    ids_spec = pl.BlockSpec((tile_rows, 1), lambda i: (i, 0))
    table_spec = pl.BlockSpec((Vp, Vp), lambda i: (0, 0))
    logits_spec = pl.BlockSpec((tile_rows, Vp), lambda i: (i, 0))
    loss_spec = pl.BlockSpec((tile_rows, 1), lambda i: (i, 0))

    # Resident table + double-buffered tiles + headroom; only raise the scoped
    # VMEM limit when the conservative 16 MiB default would not cover it.
    vmem_est = (Vp * Vp * 4 + 2 * tile_rows * Vp * 4
                + 6 * tile_rows * 128 * 4 + (2 << 20))
    compiler_params = pltpu.CompilerParams(
        dimension_semantics=("parallel",),
        vmem_limit_bytes=vmem_est if vmem_est > (16 << 20) else None)

    if targets is None:
        logits_p = pl.pallas_call(
            _bigram_logits_kernel,
            out_shape=jax.ShapeDtypeStruct((Np, Vp), jnp.float32),
            grid_spec=pltpu.PrefetchScalarGridSpec(
                num_scalar_prefetch=0, grid=(G,),
                in_specs=[ids_spec, table_spec],
                out_specs=logits_spec),
            compiler_params=compiler_params,
        )(idx_flat, table_p)
        return logits_p[:N, :V].reshape(B, T, V), None

    tgt_flat = jnp.pad(targets.reshape(N, 1).astype(jnp.int32),
                       ((0, Np - N), (0, 0)))

    if not return_logits:
        loss_rows = pl.pallas_call(
            functools.partial(_bigram_loss_only_kernel, n_valid=N),
            out_shape=jax.ShapeDtypeStruct((Np, 1), jnp.float32),
            grid_spec=pltpu.PrefetchScalarGridSpec(
                num_scalar_prefetch=0, grid=(G,),
                in_specs=[ids_spec, ids_spec, table_spec],
                out_specs=loss_spec),
            compiler_params=compiler_params,
        )(idx_flat, tgt_flat, table_p)
        return None, jnp.sum(loss_rows) / N      # padded rows contribute 0

    logits_p, loss_rows = pl.pallas_call(
        functools.partial(_bigram_loss_kernel, n_valid=N),
        out_shape=(jax.ShapeDtypeStruct((Np, Vp), jnp.float32),
                   jax.ShapeDtypeStruct((Np, 1), jnp.float32)),
        grid_spec=pltpu.PrefetchScalarGridSpec(
            num_scalar_prefetch=0, grid=(G,),
            in_specs=[ids_spec, ids_spec, table_spec],
            out_specs=[logits_spec, loss_spec]),
        compiler_params=compiler_params,
    )(idx_flat, tgt_flat, table_p)

    # TODO(synk): the [:N, :V] slice is not lane-aligned (relayout copy);
    # callers that can consume the padded (Np, Vp) layout should use logits_p.
    return logits_p[:N, :V], jnp.sum(loss_rows) / N


def bigram_last_token_logits(idx, table):
    """Decode fast path: logits only for the last position of each sequence."""
    logits, _ = bigram_forward(idx[:, -1:], table, None)     # (B, 1, V)
    return logits[:, 0, :]


def bigram_generate(key, idx, table, max_new_tokens):
    """Autoregressive sampling (host loop; torch.multinomial -> categorical)."""
    for _ in range(max_new_tokens):
        key, sub = jax.random.split(key)
        logits = bigram_last_token_logits(idx, table)          # (B, V)
        nxt = jax.random.categorical(sub, logits, axis=-1).astype(idx.dtype)
        idx = jnp.concatenate([idx, nxt[:, None]], axis=1)
    return idx


def _reference_forward(idx, table, targets):
    logits = table[idx]                                        # (B, T, V)
    B, T, V = logits.shape
    logits2d = logits.reshape(B * T, V)
    t = targets.reshape(B * T)
    lse = jax.scipy.special.logsumexp(logits2d, axis=-1)
    correct = jnp.take_along_axis(logits2d, t[:, None], axis=-1)[:, 0]
    return logits2d, jnp.mean(lse - correct)


if __name__ == "__main__":
    key = jax.random.PRNGKey(0)
    k_tab, k_idx, k_tgt, k_gen = jax.random.split(key, 4)

    vocab_size = 65          # e.g. len(chars) for a tiny-shakespeare char vocab
    B, T = 2, 8

    # Deterministic init of nn.Embedding(vocab_size, vocab_size).weight.
    table = jax.random.normal(k_tab, (vocab_size, vocab_size), jnp.float32)
    idx = jax.random.randint(k_idx, (B, T), 0, vocab_size, jnp.int32)
    targets = jax.random.randint(k_tgt, (B, T), 0, vocab_size, jnp.int32)

    ref_logits, ref_loss = _reference_forward(idx, table, targets)

    # Full forward (logits + loss), matching the PyTorch module's return.
    logits, loss = bigram_forward(idx, table, targets)
    jax.block_until_ready((logits, loss))
    assert logits.shape == (B * T, vocab_size)
    assert jnp.allclose(logits, ref_logits, atol=1e-5)
    assert jnp.allclose(loss, ref_loss, atol=1e-5)

    # Loss-only fast path (no logits HBM writeback).
    none_logits, loss_only = bigram_forward(idx, table, targets,
                                            return_logits=False)
    jax.block_until_ready(loss_only)
    assert none_logits is None
    assert jnp.allclose(loss_only, ref_loss, atol=1e-5)

    # targets=None branch: (B, T, V) logits, loss is None.
    logits_btc, no_loss = bigram_forward(idx, table, None)
    jax.block_until_ready(logits_btc)
    assert logits_btc.shape == (B, T, vocab_size) and no_loss is None
    assert jnp.allclose(logits_btc.reshape(B * T, vocab_size), ref_logits,
                        atol=1e-5)

    # Decode path: last-token logits + a short generate() roll-out.
    last = bigram_last_token_logits(idx, table)
    jax.block_until_ready(last)
    assert jnp.allclose(last, table[idx[:, -1]], atol=1e-5)
    out_idx = bigram_generate(k_gen, idx, table, max_new_tokens=3)
    jax.block_until_ready(out_idx)
    assert out_idx.shape == (B, T + 3)
    assert bool(jnp.all((out_idx >= 0) & (out_idx < vocab_size)))

    print("KERNEL_OK")
</pallas_src>

<mosaic_0001>
module attributes {stable_mosaic.version = 11 : i64} {
  func.func @_bigram_loss_kernel(%arg0: i32, %arg1: memref<16x1xi32, #tpu.memory_space<vmem>>, %arg2: memref<16x1xi32, #tpu.memory_space<vmem>>, %arg3: memref<128x128xf32, #tpu.memory_space<vmem>>, %arg4: memref<16x128xf32, #tpu.memory_space<vmem>>, %arg5: memref<16x1xf32, #tpu.memory_space<vmem>>) attributes {dimension_semantics = [#tpu.dimension_semantics<parallel>], iteration_bounds = array<i64: 1>, scalar_prefetch = 0 : i64, scratch_operands = 0 : i64, tpu.core_type = #tpu.core_type<tc>, window_params = [{transform_indices = @transform_0, window_bounds = array<i64: 16, 1>}, {transform_indices = @transform_1, window_bounds = array<i64: 16, 1>}, {pipeline_mode = #tpu.pipeline_mode<synchronous>, transform_indices = @transform_2, window_bounds = array<i64: 128, 128>}, {transform_indices = @transform_3, window_bounds = array<i64: 16, 128>}, {transform_indices = @transform_4, window_bounds = array<i64: 16, 1>}]} {
    %0 = tpu.iota {dimensions = array<i32: 1>} : vector<16x128xi32>
    %c0 = arith.constant 0 : index
    %c0_0 = arith.constant 0 : index
    %1 = vector.load %arg1[%c0, %c0_0] : memref<16x1xi32, #tpu.memory_space<vmem>>, vector<16x1xi32>
    %2 = vector.broadcast %1 : vector<16x1xi32> to vector<16x128xi32>
    %3 = arith.cmpi eq, %0, %2 : vector<16x128xi32>
    %4 = arith.extui %3 : vector<16x128xi1> to vector<16x128xi32>
    %5 = arith.sitofp %4 : vector<16x128xi32> to vector<16x128xf32>
    %c0_1 = arith.constant 0 : index
    %c0_2 = arith.constant 0 : index
    %6 = vector.load %arg3[%c0_1, %c0_2] : memref<128x128xf32, #tpu.memory_space<vmem>>, vector<128x128xf32>
    %cst = arith.constant dense<0.000000e+00> : vector<16x128xf32>
    %7 = tpu.matmul %5, %6, %cst {dimension_numbers = #tpu.dot_dimension_numbers<[1], [0], [0], [1], [0, 0, 1, 1], [], []>} : vector<16x128xf32>, vector<128x128xf32>, vector<16x128xf32> -> vector<16x128xf32>
    %c0_3 = arith.constant 0 : index
    %c0_4 = arith.constant 0 : index
    %8 = vector.load %arg4[%c0_3, %c0_4] : memref<16x128xf32, #tpu.memory_space<vmem>>, vector<16x128xf32>
    tpu.vector_store %arg4[%c0_3, %c0_4], %7 {strides = array<i32>} : memref<16x128xf32, #tpu.memory_space<vmem>>, vector<16x128xf32>,
    %cst_5 = arith.constant dense<0xFF800000> : vector<16xf32>
    %9 = vector.multi_reduction <maximumf>, %7, %cst_5 [1] : vector<16x128xf32> to vector<16xf32>
    %10 = vector.shape_cast %9 : vector<16xf32> to vector<16x1xf32>
    %11 = vector.broadcast %10 : vector<16x1xf32> to vector<16x128xf32>
    %12 = arith.subf %7, %11 : vector<16x128xf32>
    %13 = math.exp %12 : vector<16x128xf32>
    %cst_6 = arith.constant dense<0.000000e+00> : vector<16xf32>
    %14 = vector.multi_reduction <add>, %13, %cst_6 [1] : vector<16x128xf32> to vector<16xf32>
    %15 = vector.shape_cast %14 : vector<16xf32> to vector<16x1xf32>
    %16 = math.log %15 : vector<16x1xf32>
    %17 = arith.addf %10, %16 : vector<16x1xf32>
    %c0_7 = arith.constant 0 : index
    %c0_8 = arith.constant 0 : index
    %18 = vector.load %arg2[%c0_7, %c0_8] : memref<16x1xi32, #tpu.memory_space<vmem>>, vector<16x1xi32>
    %19 = vector.broadcast %18 : vector<16x1xi32> to vector<16x128xi32>
    %20 = arith.cmpi eq, %0, %19 : vector<16x128xi32>
    %21 = arith.extui %20 : vector<16x128xi1> to vector<16x128xi32>
    %22 = arith.sitofp %21 : vector<16x128xi32> to vector<16x128xf32>
    %23 = arith.mulf %22, %7 : vector<16x128xf32>
    %cst_9 = arith.constant dense<0.000000e+00> : vector<16xf32>
    %24 = vector.multi_reduction <add>, %23, %cst_9 [1] : vector<16x128xf32> to vector<16xf32>
    %25 = vector.shape_cast %24 : vector<16xf32> to vector<16x1xf32>
    %26 = tpu.iota {dimensions = array<i32: 0>} : vector<16x1xi32>
    %c16_i32 = arith.constant 16 : i32
    %27 = arith.muli %arg0, %c16_i32 : i32
    %28 = vector.broadcast %27 : i32 to vector<16x1xi32>
    %29 = arith.addi %26, %28 : vector<16x1xi32>
    %c16_i32_10 = arith.constant 16 : i32
    %30 = vector.broadcast %c16_i32_10 : i32 to vector<16x1xi32>
    %31 = arith.cmpi slt, %29, %30 : vector<16x1xi32>
    %32 = arith.subf %17, %25 : vector<16x1xf32>
    %cst_11 = arith.constant 0.000000e+00 : f32
    %33 = vector.broadcast %cst_11 : f32 to vector<16x1xf32>
    %34 = arith.select %31, %32, %33 : vector<16x1xi1>, vector<16x1xf32>
    %c0_12 = arith.constant 0 : index
    %c0_13 = arith.constant 0 : index
    %35 = vector.load %arg5[%c0_12, %c0_13] : memref<16x1xf32, #tpu.memory_space<vmem>>, vector<16x1xf32>
    tpu.vector_store %arg5[%c0_12, %c0_13], %34 {strides = array<i32>} : memref<16x1xf32, #tpu.memory_space<vmem>>, vector<16x1xf32>,
    return
  }
  func.func @transform_0(%arg0: i32) -> (i32, i32) {
    %c0_i32 = arith.constant 0 : i32
    %c0_i32_0 = arith.constant 0 : i32
    return %arg0, %c0_i32 : i32, i32
  }
  func.func @transform_1(%arg0: i32) -> (i32, i32) {
    %c0_i32 = arith.constant 0 : i32
    %c0_i32_0 = arith.constant 0 : i32
    return %arg0, %c0_i32 : i32, i32
  }
  func.func @transform_2(%arg0: i32) -> (i32, i32) {
    %c0_i32 = arith.constant 0 : i32
    %c0_i32_0 = arith.constant 0 : i32
    %c0_i32_1 = arith.constant 0 : i32
    return %c0_i32, %c0_i32_0 : i32, i32
  }
  func.func @transform_3(%arg0: i32) -> (i32, i32) {
    %c0_i32 = arith.constant 0 : i32
    %c0_i32_0 = arith.constant 0 : i32
    return %arg0, %c0_i32 : i32, i32
  }
  func.func @transform_4(%arg0: i32) -> (i32, i32) {
    %c0_i32 = arith.constant 0 : i32
    %c0_i32_0 = arith.constant 0 : i32
    return %arg0, %c0_i32 : i32, i32
  }
}

</mosaic_0001>

<llo_original>
// kernel: tpu_custom_call.1
$region0: #{tpu_custom_call.1}
  #allocation0 [shape = 'u32[]', space=smem, size = 0x4, offset = 0x4, fixed_abs, tag = 'smem constant byte address 0x4 - core index']
  #allocation1 [shape = 'u32[144,128]{1,0:T(1,128)}', space=vmem, size = 0x12000, scoped, tag = 'internal scratch']
  %s0 = inlined_call_operand.vmem [shape: s32[16,1], index: 0, kind: input, shape index: {}]
  %s1 = inlined_call_operand.vmem [shape: s32[16,1], index: 1, kind: input, shape index: {}]
  %s2 = inlined_call_operand.hbm [shape: f32[128,128], index: 2, kind: input, shape index: {}]
  %s3 = inlined_call_operand.hbm [shape: f32[16,128], index: 3, kind: output, shape index: {0}]
  %s4 = inlined_call_operand.vmem [shape: f32[16,1], index: 4, kind: output, shape index: {1}]
  %5 = xla_tuple %s3, %s4
  %s6 = sld [smem:[#allocation0]]
  $region34: #{tpu_custom_call.1} parent=0
    _
  %s8 = ssub.s32 1, %s6
  %s9 = scalar_select 0, %s8, %s6
  $region1: #{tpu_custom_call.1} parent=0
    #allocation2 [shape = 'u8[65536]{0}', space=vmem, size = 0x10000, scoped, tag = 'input window, operand 2, single buffered']
    #allocation3 [shape = 's32[1]{0}', space=sflag, size = 0x4, scoped, tag = 'scoped memory for tpu_custom_call.1']
    #allocation4 [shape = 's32[1]{0}', space=sflag, size = 0x4, scoped, tag = 'scoped memory for tpu_custom_call.1']
    #allocation5 [shape = 'u8[8192]{0}', space=vmem, size = 0x2000, scoped, tag = 'output window, operand 0, single buffered']
    %10 = vsyncpa [#allocation3], 0
    %11 = vsyncpa [#allocation4], 0
    // Predicated region
    $region2: #{tpu_custom_call.1} parent=1 // pred_check
      _
    $region3: #{tpu_custom_call.1} parent=1 // pred_check_branch
      %13 = sbr.rel (0) target = $region5
    $region4: #{tpu_custom_call.1} parent=1 // pred_region
      _
    $region5: #{tpu_custom_call.1} parent=1 // pred_fallthru
      _
    // Predicated region
    $region6: #{tpu_custom_call.1} parent=1 // pred_check
      _
    $region7: #{tpu_custom_call.1} parent=1 // pred_check_branch
      %15 = sbr.rel (0) target = $region9
    $region8: #{tpu_custom_call.1} parent=1 // pred_region
      _
    $region9: #{tpu_custom_call.1} parent=1 // pred_fallthru
      _
    // Predicated region
    $region10: #{tpu_custom_call.1} parent=1 // pred_check
      _
    $region11: #{tpu_custom_call.1} parent=1 // pred_check_branch
      %17 = sbr.rel (0) target = $region13
    $region12: #{tpu_custom_call.1} parent=1 // pred_region
      %s19 = ssub.s32 2048, 2048
      %20 = vsyncadd [#allocation3], %s19
      %s21 = sshll.u32 [#allocation2], 4
      %s22 = int_to_ptr.vmem [resolvable:$true] %s21
      %27 = dma.hbm_to_vmem [thread:$0]  %s2, 2048, %s22, [#allocation3], 128, 128, 8
    $region13: #{tpu_custom_call.1} parent=1 // pred_fallthru
      _
    // Predicated region
    $region14: #{tpu_custom_call.1} parent=1 // pred_check
      _
    $region15: #{tpu_custom_call.1} parent=1 // pred_check_branch
      %29 = sbr.rel (0) target = $region17
    $region16: #{tpu_custom_call.1} parent=1 // pred_region
      %30 = dma.done [#allocation3], 2048
    $region17: #{tpu_custom_call.1} parent=1 // pred_fallthru
      _
    %v31 = vlaneseq
    %v32 = vand.u32 %v31, 127
    %v33 = vld [vmem:[%s0] sm:$0xff]
    %v34 = vld [vmem:[%s0 + $0x8] sm:$0xff]
    %35 = vset.pattern.permute.xlu0 0
    %36 = vperm.xlu0 %35, %v33
    %v37 = vpop.permute.xlu0 %36
    %38 = vset.pattern.permute.xlu0 0
    %39 = vperm.xlu0 %38, %v34
    %v40 = vpop.permute.xlu0 %39
    %vm41 = vcmp.eq.s32.totalorder %v32, %v37
    %vm42 = vcmp.eq.s32.totalorder %v32, %v40
    %v43 = vsel %vm41, 1, 0
    %v44 = vsel %vm42, 1, 0
    %v45 = vcvt.s32.f32 %v43
    %v46 = vcvt.s32.f32 %v44
    %v47 = vld [vmem:[#allocation2] sm:$0xff]
    %v48 = vld [vmem:[#allocation2 + $0x8] sm:$0xff]
    %v49 = vld [vmem:[#allocation2 + $0x10] sm:$0xff]
    %v50 = vld [vmem:[#allocation2 + $0x18] sm:$0xff]
    %v51 = vld [vmem:[#allocation2 + $0x20] sm:$0xff]
    %v52 = vld [vmem:[#allocation2 + $0x28] sm:$0xff]
    %v53 = vld [vmem:[#allocation2 + $0x30] sm:$0xff]
    %v54 = vld [vmem:[#allocation2 + $0x38] sm:$0xff]
    %v55 = vld [vmem:[#allocation2 + $0x40] sm:$0xff]
    %v56 = vld [vmem:[#allocation2 + $0x48] sm:$0xff]
    %v57 = vld [vmem:[#allocation2 + $0x50] sm:$0xff]
    %v58 = vld [vmem:[#allocation2 + $0x58] sm:$0xff]
    %v59 = vld [vmem:[#allocation2 + $0x60] sm:$0xff]
    %v60 = vld [vmem:[#allocation2 + $0x68] sm:$0xff]
    %v61 = vld [vmem:[#allocation2 + $0x70] sm:$0xff]
    %v62 = vld [vmem:[#allocation2 + $0x78] sm:$0xff]
    %63 = vmatprep.subr.mxu0 0.0
    %64 = vmatpush1.msra.mxu0 %v47
    %65 = vmatprep.subr.mxu0 0.0
    %66 = vmatpush1.msra.mxu0 %v48
    %67 = vmatprep.subr.mxu0 0.0
    %68 = vmatpush1.msra.mxu0 %v49
    %69 = vmatprep.subr.mxu0 0.0
    %70 = vmatpush1.msra.mxu0 %v50
    %71 = vmatprep.subr.mxu0 0.0
    %72 = vmatpush1.msra.mxu0 %v51
    %73 = vmatprep.subr.mxu0 0.0
    %74 = vmatpush1.msra.mxu0 %v52
    %75 = vmatprep.subr.mxu0 0.0
    %76 = vmatpush1.msra.mxu0 %v53
    %77 = vmatprep.subr.mxu0 0.0
    %78 = vmatpush1.msra.mxu0 %v54
    %79 = vmatprep.subr.mxu0 0.0
    %80 = vmatpush1.msra.mxu0 %v55
    %81 = vmatprep.subr.mxu0 0.0
    %82 = vmatpush1.msra.mxu0 %v56
    %83 = vmatprep.subr.mxu0 0.0
    %84 = vmatpush1.msra.mxu0 %v57
    %85 = vmatprep.subr.mxu0 0.0
    %86 = vmatpush1.msra.mxu0 %v58
    %87 = vmatprep.subr.mxu0 0.0
    %88 = vmatpush1.msra.mxu0 %v59
    %89 = vmatprep.subr.mxu0 0.0
    %90 = vmatpush1.msra.mxu0 %v60
    %91 = vmatprep.subr.mxu0 0.0
    %92 = vmatpush1.msra.mxu0 %v61
    %93 = vmatprep.subr.mxu0 0.0
    %94 = vmatpush1.msra.mxu0 %v62
    %95 = vmatprep.subr.mxu0 0.0
    %96 = vmatpush1.msra.mxu0 0.0
    %97 = vmatprep.subr.mxu0 0.0
    %98 = vmatpush1.msra.mxu0 0.0
    %99 = vmatprep.subr.mxu0 0.0
    %100 = vmatpush1.msra.mxu0 0.0
    %101 = vmatprep.subr.mxu0 0.0
    %102 = vmatpush1.msra.mxu0 0.0
    %103 = vmatprep.subr.mxu0 0.0
    %104 = vmatpush1.msra.mxu0 0.0
    %105 = vmatprep.subr.mxu0 0.0
    %106 = vmatpush1.msra.mxu0 0.0
    %107 = vmatprep.subr.mxu0 0.0
    %108 = vmatpush1.msra.mxu0 0.0
    %109 = vmatprep.subr.mxu0 0.0
    %110 = vmatpush1.msra.mxu0 0.0
    %111 = vmatprep.subr.mxu0 0.0
    %112 = vmatpush1.msra.mxu0 0.0
    %113 = vmatprep.subr.mxu0 0.0
    %114 = vmatpush1.msra.mxu0 0.0
    %115 = vmatprep.subr.mxu0 0.0
    %116 = vmatpush1.msra.mxu0 0.0
    %117 = vmatprep.subr.mxu0 0.0
    %118 = vmatpush1.msra.mxu0 0.0
    %119 = vmatprep.subr.mxu0 0.0
    %120 = vmatpush1.msra.mxu0 0.0
    %121 = vmatprep.subr.mxu0 0.0
    %122 = vmatpush1.msra.mxu0 0.0
    %123 = vmatprep.subr.mxu0 0.0
    %124 = vmatpush1.msra.mxu0 0.0
    %125 = vmatprep.subr.mxu0 0.0
    %126 = vmatpush1.msra.mxu0 0.0
    %127 = vmatprep.mubr.f32.mxu0 0.0
    %128 = vmatmul.mubr.f32.gmra.mrb[0].mxu0 %v45
    %v129 = vpop.f32.mrb[0].mxu0
    %v130 = vadd.f32 0.0, %v129
    %v131 = vpop.f32.mrb[0].mxu0
    %132 = vmatprep.mubr.f32.mxu0 0.0
    %133 = vmatmul.mubr.f32.gmra.mrb[0].mxu0 %v46
    %v134 = vpop.f32.mrb[0].mxu0
    %v135 = vadd.f32 0.0, %v134
    %v136 = vpop.f32.mrb[0].mxu0
    %137 = vdwg.mxu0
    %138 = vst [vmem:[#allocation5] sm:$0xff] %v130
    %139 = vst [vmem:[#allocation5 + $0x8] sm:$0xff] %v135
    %140 = vmax.xlane.f32.xlu0 %v130
    %v141 = vpop.xlane.xlu0 %140
    %142 = vmax.xlane.f32.xlu0 %v135
    %v143 = vpop.xlane.xlu0 %142
    %v144 = vsub.f32 %v130, %v141
    %v145 = vsub.f32 %v135, %v143
    %v146 = vmul.f32 %v144, 1.442695
    %v147 = vpow.pop %v146
    %v148 = vmul.f32 %v145, 1.442695
    %v149 = vpow.pop %v148
    %150 = vadd.xlane.f32.xlu0 %v147
    %v151 = vpop.xlane.xlu0 %150
    %152 = vadd.xlane.f32.xlu0 %v149
    %v153 = vpop.xlane.xlu0 %152
    %v154 = vlog2.pop %v151
    %v155 = vmul.f32 %v154, 0.6931472
    %v156 = vlog2.pop %v153
    %v157 = vmul.f32 %v156, 0.6931472
    %v158 = vadd.f32 %v141, %v155
    %v159 = vadd.f32 %v143, %v157
    %v160 = vld [vmem:[%s1] sm:$0xff]
    %v161 = vld [vmem:[%s1 + $0x8] sm:$0xff]
    %162 = vset.pattern.permute.xlu0 0
    %163 = vperm.xlu0 %162, %v160
    %v164 = vpop.permute.xlu0 %163
    %165 = vset.pattern.permute.xlu0 0
    %166 = vperm.xlu0 %165, %v161
    %v167 = vpop.permute.xlu0 %166
    %vm168 = vcmp.eq.s32.totalorder %v32, %v164
    %vm169 = vcmp.eq.s32.totalorder %v32, %v167
    %v170 = vsel %vm168, 1, 0
    %v171 = vsel %vm169, 1, 0
    %v172 = vcvt.s32.f32 %v170
    %v173 = vcvt.s32.f32 %v171
    %v174 = vmul.f32 %v172, %v130
    %v175 = vmul.f32 %v173, %v135
    %176 = vadd.xlane.f32.xlu0 %v174
    %v177 = vpop.xlane.xlu0 %176
    %178 = vadd.xlane.f32.xlu0 %v175
    %v179 = vpop.xlane.xlu0 %178
    %v180 = vlaneseq
    %v181 = vshrl.u32 %v180, 7
    %v182 = vadd.s32 %v181, 8
    %s183 = smul.u32 0, 16
    %v184 = vstv %s183
    %v185 = vadd.s32 %v181, %v184
    %v186 = vadd.s32 %v182, %v184
    %vm187 = vcmp.lt.s32.totalorder %v185, 16
    %vm188 = vcmp.lt.s32.totalorder %v186, 16
    %v189 = vsub.f32 %v158, %v177
    %v190 = vsub.f32 %v159, %v179
    %v191 = vsel %vm187, %v189, 0.0
    %v192 = vsel %vm188, %v190, 0.0
    %vm193 = vcmask 7168
    %194 = vst.msk [vmem:[%s4] sm:$0xff] %vm193, %v191
    %195 = vst.msk [vmem:[%s4 + $0x8] sm:$0xff] %vm193, %v192
    // Predicated region
    $region18: #{tpu_custom_call.1} parent=1 // pred_check
      _
    $region19: #{tpu_custom_call.1} parent=1 // pred_check_branch
      %197 = sbr.rel (0) target = $region21
    $region20: #{tpu_custom_call.1} parent=1 // pred_region
      %s199 = ssub.s32 256, 256
      %200 = vsyncadd [#allocation4], %s199
      %s201 = sshll.u32 [#allocation5], 4
      %s202 = int_to_ptr.vmem [resolvable:$true] %s201
      %207 = dma.vmem_to_hbm [thread:$0]  %s202, 256, %s3, [#allocation4], 128, 128, 8
    $region21: #{tpu_custom_call.1} parent=1 // pred_fallthru
      _
    // Predicated region
    $region22: #{tpu_custom_call.1} parent=1 // pred_check
      _
    $region23: #{tpu_custom_call.1} parent=1 // pred_check_branch
      %209 = sbr.rel (0) target = $region25
    $region24: #{tpu_custom_call.1} parent=1 // pred_region
      _
    $region25: #{tpu_custom_call.1} parent=1 // pred_fallthru
      _
    // Predicated region
    $region26: #{tpu_custom_call.1} parent=1 // pred_check
      _
    $region27: #{tpu_custom_call.1} parent=1 // pred_check_branch
      %211 = sbr.rel (0) target = $region29
    $region28: #{tpu_custom_call.1} parent=1 // pred_region
      %212 = dma.done [#allocation4], 256
    $region29: #{tpu_custom_call.1} parent=1 // pred_fallthru
      _
    // Predicated region
    $region30: #{tpu_custom_call.1} parent=1 // pred_check
      _
    $region31: #{tpu_custom_call.1} parent=1 // pred_check_branch
      %214 = sbr.rel (0) target = $region33
    $region32: #{tpu_custom_call.1} parent=1 // pred_region
      _
    $region33: #{tpu_custom_call.1} parent=1 // pred_fallthru
      _
    %215 = vsyncpa [#allocation3], 1
    %216 = vsyncpa [#allocation4], 1

</llo_original>
